<compile_context>
chip_gen: v6e
topology: v6e:2x2x1
jax: 0.10.0
libtpu: 0.0.40
codegen_flags: <defaults>
</compile_context>

<pallas_src>
import functools

import jax
import jax.numpy as jnp
from jax import lax
from jax.experimental import pallas as pl
from jax.experimental.pallas import tpu as pltpu

EPS = 1e-5


def shsa_kernel(x_ref, wqkv_ref, bqkv_ref, wpa_ref, wpb_ref, bproj_ref,
                o_ref, *, nb, pdim, qk_dim, n):
    # Grid-invariant weights/biases: load once per invocation (hoisted out of
    # the per-batch work below).
    wqkv = wqkv_ref[...]          # (h, pdim)  GN affine + attn scale pre-folded
    bqkv = bqkv_ref[...]          # (h, 1)
    wpa = wpa_ref[...]            # (dim, pdim)
    wpb = wpb_ref[...]            # (dim, dim - pdim)
    bproj = bproj_ref[...]        # (dim, 1)

    # --- GroupNorm (1 group over the first pdim channels), per batch -------
    xn_parts = []
    x2_parts = []
    for b in range(nb):                               # nb is small & static
        x = x_ref[b]                                  # (dim, N) channels-first
        x1 = x[:pdim, :]
        x2_parts.append(x[pdim:, :])
        mu = jnp.mean(x1)
        xc = x1 - mu                                  # two-pass variance:
        var = jnp.mean(xc * xc)                       # avoids E[x^2]-mu^2 cancel
        xn_parts.append(xc * lax.rsqrt(var + EPS))
    # Lane-stack the nb batches so the weight-shared matmuls run at lane
    # width nb*N (amortizes MXU weight fill, lane-denser tiles).
    xn_all = xn_parts[0] if nb == 1 else jnp.concatenate(xn_parts, axis=1)
    x2_all = x2_parts[0] if nb == 1 else jnp.concatenate(x2_parts, axis=1)

    # --- fused qkv 1x1 Conv2d_BN (pdim -> 2*qk_dim + pdim), all nb batches --
    qkv = jnp.dot(wqkv, xn_all, preferred_element_type=jnp.float32) + bqkv

    # --- per-batch attention (softmax normalization is per batch) ----------
    x1o_parts = []
    for b in range(nb):
        q = qkv[:qk_dim, b * n:(b + 1) * n]           # (qk_dim, N), pre-scaled
        k = qkv[qk_dim:2 * qk_dim, b * n:(b + 1) * n]  # (qk_dim, N)
        v = qkv[2 * qk_dim:, b * n:(b + 1) * n]       # (pdim, N)

        # scores[nq, nk] = sum_d q[d, nq] * k[d, nk]  -- lhs-transposed
        # contraction handled natively by the MXU (no explicit q.T).
        scores = lax.dot_general(q, k, (((0,), (0,)), ((), ())),
                                 preferred_element_type=jnp.float32)   # (N, N)
        scores = scores - jnp.max(scores, axis=-1, keepdims=True)
        p = jnp.exp(scores)
        attn = p / jnp.sum(p, axis=-1, keepdims=True)
        # TODO(synk): for realistic SHViT resolutions (N up to ~3136) replace
        # this dense (N, N) path with a flash-style KV-tiled online softmax so
        # it fits v7x's 64 MiB VMEM, and add a parallel Q-tile grid axis.

        # x1o[c, nq] = sum_nk v[c, nk] * attn[nq, nk]  (rhs-transposed dot).
        x1o_parts.append(
            lax.dot_general(v, attn, (((1,), (1,)), ((), ())),
                            preferred_element_type=jnp.float32))       # (pdim, N)
    x1o_all = x1o_parts[0] if nb == 1 else jnp.concatenate(x1o_parts, axis=1)

    # --- proj: ReLU -> fused 1x1 Conv2d_BN(dim -> dim), concat-free --------
    #   out = Wp[:, :pdim] @ relu(x1o) + Wp[:, pdim:] @ relu(x2) + b
    y1 = jnp.maximum(x1o_all, 0.0)
    y2 = jnp.maximum(x2_all, 0.0)
    out = (jnp.dot(wpa, y1, preferred_element_type=jnp.float32)
           + jnp.dot(wpb, y2, preferred_element_type=jnp.float32)
           + bproj)                                                    # (dim, nb*N)

    for b in range(nb):
        o_ref[b] = out[:, b * n:(b + 1) * n].astype(o_ref.dtype)


def _pick_nb(batch, dim, n):
    """Small batches-per-block: biggest divisor of `batch` <= 8 whose x/out
    blocks stay within a few MiB, keeping >= 2 grid steps when possible so
    BlockSpec double-buffering can overlap DMA with compute."""
    budget = 4 * 1024 * 1024                       # bytes per (nb, dim, N) block
    best = 1
    for cand in range(1, min(batch, 8) + 1):
        if batch % cand:
            continue
        if cand * dim * n * 4 <= budget:
            best = cand
    if best == batch and batch > 1:
        for cand in range(best - 1, 0, -1):
            if batch % cand == 0 and batch // cand >= 2:
                best = cand
                break
    return best


@functools.partial(jax.jit, static_argnames=("pdim", "qk_dim"))
def shsa_forward(x_nchw, params, *, pdim, qk_dim):
    """x_nchw: [B, dim, H, W] float32 -> [B, dim, H, W] float32."""
    gamma, beta, w_qkv, b_qkv, w_proj, b_proj = params
    B, dim, H, W = x_nchw.shape
    N = H * W
    h = 2 * qk_dim + pdim
    scale = float(qk_dim) ** -0.5

    # (out, in) channels-first qkv weight.  Attention scale folded into the q
    # rows; GroupNorm affine folded in as well: W' = (W*scale) * gamma (per
    # input channel), b' = (W*scale) @ beta + b*scale.
    scale_vec = jnp.concatenate([jnp.full((qk_dim,), scale, jnp.float32),
                                 jnp.ones((h - qk_dim,), jnp.float32)])
    wqkv_s = w_qkv.T * scale_vec[:, None]               # (h, pdim)
    bqkv_s = b_qkv[0] * scale_vec                       # (h,)
    bqkv_cf = (wqkv_s @ beta[0] + bqkv_s)[:, None]      # (h, 1)
    wqkv_cf = wqkv_s * gamma[0][None, :]                # (h, pdim)

    # Projection weight pre-split at the pdim boundary (concat-free proj).
    wp_a = w_proj[:pdim, :].T                           # (dim, pdim)
    wp_b = w_proj[pdim:, :].T                           # (dim, dim - pdim)
    bp_cf = b_proj[0][:, None]                          # (dim, 1)

    # NCHW -> [B, dim, N]: free reshape, no transpose.
    x = x_nchw.reshape(B, dim, N)

    nb = _pick_nb(B, dim, N)
    kernel = functools.partial(shsa_kernel, nb=nb, pdim=pdim, qk_dim=qk_dim, n=N)

    # Scoped VMEM sized from the actual block / scratch footprint with 2x
    # headroom, clamped to v7x's 64 MiB physical budget.
    itemsize = 4
    io_bytes = 2 * 2 * nb * dim * N * itemsize                 # in+out, 2 bufs
    w_bytes = 2 * (h * pdim + h + dim * pdim
                   + dim * (dim - pdim) + dim) * itemsize
    scratch_bytes = (nb * (h * N + 2 * dim * N) + 3 * N * N) * itemsize
    vmem_limit = int(min(max(2 * (io_bytes + w_bytes + scratch_bytes), 8 << 20),
                         64 << 20))

    out = pl.pallas_call(
        kernel,
        out_shape=jax.ShapeDtypeStruct((B, dim, N), jnp.float32),
        grid_spec=pl.GridSpec(
            grid=(B // nb,),
            in_specs=[
                pl.BlockSpec((nb, dim, N), lambda g: (g, 0, 0)),
                pl.BlockSpec((h, pdim), lambda g: (0, 0)),
                pl.BlockSpec((h, 1), lambda g: (0, 0)),
                pl.BlockSpec((dim, pdim), lambda g: (0, 0)),
                pl.BlockSpec((dim, dim - pdim), lambda g: (0, 0)),
                pl.BlockSpec((dim, 1), lambda g: (0, 0)),
            ],
            out_specs=pl.BlockSpec((nb, dim, N), lambda g: (g, 0, 0)),
        ),
        compiler_params=pltpu.CompilerParams(
            dimension_semantics=("parallel",),
            vmem_limit_bytes=vmem_limit),
    )(x, wqkv_cf, bqkv_cf, wp_a, wp_b, bp_cf)

    # [B, dim, N] -> NCHW: free reshape.
    return out.reshape(B, dim, H, W)


def shsa_reference(x_nchw, params, *, pdim, qk_dim):
    """Pure-JAX f32 reference mirroring the PyTorch forward (for validation)."""
    gamma, beta, w_qkv, b_qkv, w_proj, b_proj = params
    B, dim, H, W = x_nchw.shape
    N = H * W
    scale = float(qk_dim) ** -0.5
    eps = 1e-5

    x1 = x_nchw[:, :pdim]                                  # [B, pdim, H, W]
    x2 = x_nchw[:, pdim:]                                  # [B, dim-pdim, H, W]

    mu = jnp.mean(x1, axis=(1, 2, 3), keepdims=True)
    var = jnp.mean((x1 - mu) ** 2, axis=(1, 2, 3), keepdims=True)
    xn = (x1 - mu) / jnp.sqrt(var + eps)
    xn = xn * gamma[0][None, :, None, None] + beta[0][None, :, None, None]

    qkv = jnp.einsum('bihw,io->bohw', xn, w_qkv) + b_qkv[0][None, :, None, None]
    q = qkv[:, :qk_dim].reshape(B, qk_dim, N)
    k = qkv[:, qk_dim:2 * qk_dim].reshape(B, qk_dim, N)
    v = qkv[:, 2 * qk_dim:].reshape(B, pdim, N)

    attn = jnp.einsum('bdn,bdm->bnm', q, k) * scale        # [B, N, N]
    attn = jax.nn.softmax(attn, axis=-1)
    x1o = jnp.einsum('bcn,bmn->bcm', v, attn).reshape(B, pdim, H, W)

    y = jnp.concatenate([x1o, x2], axis=1)                 # [B, dim, H, W]
    y = jnp.maximum(y, 0.0)
    out = jnp.einsum('bihw,io->bohw', y, w_proj) + b_proj[0][None, :, None, None]
    return out


def make_params(key, dim, qk_dim, pdim):
    """Deterministic synthetic params (BN already fused into the 1x1 convs)."""
    h = 2 * qk_dim + pdim
    k1, k2, k3, k4, k5, k6 = jax.random.split(key, 6)
    gamma = 1.0 + 0.1 * jax.random.normal(k1, (1, pdim), jnp.float32)
    beta = 0.1 * jax.random.normal(k2, (1, pdim), jnp.float32)
    w_qkv = 0.2 * jax.random.normal(k3, (pdim, h), jnp.float32)    # (in, out)
    b_qkv = 0.05 * jax.random.normal(k4, (1, h), jnp.float32)
    w_proj = 0.2 * jax.random.normal(k5, (dim, dim), jnp.float32)  # (in, out)
    b_proj = 0.05 * jax.random.normal(k6, (1, dim), jnp.float32)
    return gamma, beta, w_qkv, b_qkv, w_proj, b_proj


if __name__ == "__main__":
    B, dim, H, W = 2, 32, 8, 8
    qk_dim, pdim = 16, 16

    key = jax.random.PRNGKey(0)
    kx, kp = jax.random.split(key)
    x = jax.random.normal(kx, (B, dim, H, W), jnp.float32)
    params = make_params(kp, dim, qk_dim, pdim)

    out = shsa_forward(x, params, pdim=pdim, qk_dim=qk_dim)
    out = jax.block_until_ready(out)

    ref = shsa_reference(x, params, pdim=pdim, qk_dim=qk_dim)
    assert out.shape == (B, dim, H, W)
    max_err = float(jnp.max(jnp.abs(out - ref)))
    # Loose tolerance only to absorb the TPU MXU's reduced-precision f32
    # matmul passes; structural bugs would be orders of magnitude larger.
    assert jnp.allclose(out, ref, atol=5e-2, rtol=5e-2), (
        f"mismatch vs reference (max abs err {max_err})")

    print("KERNEL_OK")
</pallas_src>

<mosaic_0001>
module attributes {stable_mosaic.version = 11 : i64} {
  func.func @shsa_kernel(%arg0: i32, %arg1: memref<1x32x64xf32, #tpu.memory_space<vmem>>, %arg2: memref<48x16xf32, #tpu.memory_space<vmem>>, %arg3: memref<48x1xf32, #tpu.memory_space<vmem>>, %arg4: memref<32x16xf32, #tpu.memory_space<vmem>>, %arg5: memref<32x16xf32, #tpu.memory_space<vmem>>, %arg6: memref<32x1xf32, #tpu.memory_space<vmem>>, %arg7: memref<1x32x64xf32, #tpu.memory_space<vmem>>) attributes {dimension_semantics = [#tpu.dimension_semantics<parallel>], iteration_bounds = array<i64: 2>, scalar_prefetch = 0 : i64, scratch_operands = 0 : i64, tpu.core_type = #tpu.core_type<tc>, window_params = [{transform_indices = @transform_0, window_bounds = array<i64: 1, 32, 64>}, {pipeline_mode = #tpu.pipeline_mode<synchronous>, transform_indices = @transform_1, window_bounds = array<i64: 48, 16>}, {pipeline_mode = #tpu.pipeline_mode<synchronous>, transform_indices = @transform_2, window_bounds = array<i64: 48, 1>}, {pipeline_mode = #tpu.pipeline_mode<synchronous>, transform_indices = @transform_3, window_bounds = array<i64: 32, 16>}, {pipeline_mode = #tpu.pipeline_mode<synchronous>, transform_indices = @transform_4, window_bounds = array<i64: 32, 16>}, {pipeline_mode = #tpu.pipeline_mode<synchronous>, transform_indices = @transform_5, window_bounds = array<i64: 32, 1>}, {transform_indices = @transform_6, window_bounds = array<i64: 1, 32, 64>}]} {
    %c0 = arith.constant 0 : index
    %c0_0 = arith.constant 0 : index
    %0 = vector.load %arg2[%c0, %c0_0] : memref<48x16xf32, #tpu.memory_space<vmem>>, vector<48x16xf32>
    %c0_1 = arith.constant 0 : index
    %c0_2 = arith.constant 0 : index
    %1 = vector.load %arg3[%c0_1, %c0_2] : memref<48x1xf32, #tpu.memory_space<vmem>>, vector<48x1xf32>
    %c0_3 = arith.constant 0 : index
    %c0_4 = arith.constant 0 : index
    %2 = vector.load %arg4[%c0_3, %c0_4] : memref<32x16xf32, #tpu.memory_space<vmem>>, vector<32x16xf32>
    %c0_5 = arith.constant 0 : index
    %c0_6 = arith.constant 0 : index
    %3 = vector.load %arg5[%c0_5, %c0_6] : memref<32x16xf32, #tpu.memory_space<vmem>>, vector<32x16xf32>
    %c0_7 = arith.constant 0 : index
    %c0_8 = arith.constant 0 : index
    %4 = vector.load %arg6[%c0_7, %c0_8] : memref<32x1xf32, #tpu.memory_space<vmem>>, vector<32x1xf32>
    %c0_9 = arith.constant 0 : index
    %c0_10 = arith.constant 0 : index
    %c0_11 = arith.constant 0 : index
    %5 = vector.load %arg1[%c0_9, %c0_10, %c0_11] : memref<1x32x64xf32, #tpu.memory_space<vmem>>, vector<1x32x64xf32>
    %6 = vector.shape_cast %5 : vector<1x32x64xf32> to vector<32x64xf32>
    %7 = vector.extract_strided_slice %6 {offsets = [0, 0], sizes = [16, 64], strides = [1, 1]} : vector<32x64xf32> to vector<16x64xf32>
    %8 = vector.extract_strided_slice %6 {offsets = [16, 0], sizes = [16, 64], strides = [1, 1]} : vector<32x64xf32> to vector<16x64xf32>
    %9 = vector.shape_cast %7 : vector<16x64xf32> to vector<1x16x64xf32>
    %cst = arith.constant dense<0.000000e+00> : vector<1xf32>
    %10 = vector.multi_reduction <add>, %9, %cst [1, 2] : vector<1x16x64xf32> to vector<1xf32>
    %11 = vector.shape_cast %10 : vector<1xf32> to vector<1x1x1xf32>
    %12 = vector.extract %11[0, 0, 0] : f32 from vector<1x1x1xf32>
    %cst_12 = arith.constant 1.024000e+03 : f32
    %13 = arith.divf %12, %cst_12 : f32
    %14 = vector.broadcast %13 : f32 to vector<16x64xf32>
    %15 = arith.subf %7, %14 : vector<16x64xf32>
    %16 = arith.mulf %15, %15 : vector<16x64xf32>
    %17 = vector.shape_cast %16 : vector<16x64xf32> to vector<1x16x64xf32>
    %cst_13 = arith.constant dense<0.000000e+00> : vector<1xf32>
    %18 = vector.multi_reduction <add>, %17, %cst_13 [1, 2] : vector<1x16x64xf32> to vector<1xf32>
    %19 = vector.shape_cast %18 : vector<1xf32> to vector<1x1x1xf32>
    %20 = vector.extract %19[0, 0, 0] : f32 from vector<1x1x1xf32>
    %cst_14 = arith.constant 1.024000e+03 : f32
    %21 = arith.divf %20, %cst_14 : f32
    %cst_15 = arith.constant 9.99999974E-6 : f32
    %22 = arith.addf %21, %cst_15 : f32
    %23 = math.rsqrt %22 : f32
    %24 = vector.broadcast %23 : f32 to vector<16x64xf32>
    %25 = arith.mulf %15, %24 : vector<16x64xf32>
    %cst_16 = arith.constant dense<0.000000e+00> : vector<48x64xf32>
    %26 = tpu.matmul %0, %25, %cst_16 {dimension_numbers = #tpu.dot_dimension_numbers<[1], [0], [0], [1], [0, 0, 1, 1], [], []>} : vector<48x16xf32>, vector<16x64xf32>, vector<48x64xf32> -> vector<48x64xf32>
    %27 = vector.broadcast %1 : vector<48x1xf32> to vector<48x64xf32>
    %28 = arith.addf %26, %27 : vector<48x64xf32>
    %29 = vector.extract_strided_slice %28 {offsets = [0, 0], sizes = [16, 64], strides = [1, 1]} : vector<48x64xf32> to vector<16x64xf32>
    %30 = vector.extract_strided_slice %28 {offsets = [16, 0], sizes = [16, 64], strides = [1, 1]} : vector<48x64xf32> to vector<16x64xf32>
    %31 = vector.extract_strided_slice %28 {offsets = [32, 0], sizes = [16, 64], strides = [1, 1]} : vector<48x64xf32> to vector<16x64xf32>
    %cst_17 = arith.constant dense<0.000000e+00> : vector<64x64xf32>
    %32 = tpu.matmul %29, %30, %cst_17 {dimension_numbers = #tpu.dot_dimension_numbers<[0], [0], [1], [1], [0, 1, 1, 1], [], []>} : vector<16x64xf32>, vector<16x64xf32>, vector<64x64xf32> -> vector<64x64xf32>
    %cst_18 = arith.constant dense<0xFF800000> : vector<64xf32>
    %33 = vector.multi_reduction <maximumf>, %32, %cst_18 [1] : vector<64x64xf32> to vector<64xf32>
    %34 = vector.shape_cast %33 : vector<64xf32> to vector<64x1xf32>
    %35 = vector.broadcast %34 : vector<64x1xf32> to vector<64x64xf32>
    %36 = arith.subf %32, %35 : vector<64x64xf32>
    %37 = math.exp %36 : vector<64x64xf32>
    %cst_19 = arith.constant dense<0.000000e+00> : vector<64xf32>
    %38 = vector.multi_reduction <add>, %37, %cst_19 [1] : vector<64x64xf32> to vector<64xf32>
    %39 = vector.shape_cast %38 : vector<64xf32> to vector<64x1xf32>
    %40 = vector.broadcast %39 : vector<64x1xf32> to vector<64x64xf32>
    %41 = arith.divf %37, %40 : vector<64x64xf32>
    %cst_20 = arith.constant dense<0.000000e+00> : vector<16x64xf32>
    %42 = tpu.matmul %31, %41, %cst_20 {dimension_numbers = #tpu.dot_dimension_numbers<[1], [1], [0], [0], [0, 0, 1, 0], [], []>} : vector<16x64xf32>, vector<64x64xf32>, vector<16x64xf32> -> vector<16x64xf32>
    %cst_21 = arith.constant 0.000000e+00 : f32
    %43 = vector.broadcast %cst_21 : f32 to vector<16x64xf32>
    %44 = arith.maximumf %42, %43 : vector<16x64xf32>
    %cst_22 = arith.constant 0.000000e+00 : f32
    %45 = vector.broadcast %cst_22 : f32 to vector<16x64xf32>
    %46 = arith.maximumf %8, %45 : vector<16x64xf32>
    %cst_23 = arith.constant dense<0.000000e+00> : vector<32x64xf32>
    %47 = tpu.matmul %2, %44, %cst_23 {dimension_numbers = #tpu.dot_dimension_numbers<[1], [0], [0], [1], [0, 0, 1, 1], [], []>} : vector<32x16xf32>, vector<16x64xf32>, vector<32x64xf32> -> vector<32x64xf32>
    %cst_24 = arith.constant dense<0.000000e+00> : vector<32x64xf32>
    %48 = tpu.matmul %3, %46, %cst_24 {dimension_numbers = #tpu.dot_dimension_numbers<[1], [0], [0], [1], [0, 0, 1, 1], [], []>} : vector<32x16xf32>, vector<16x64xf32>, vector<32x64xf32> -> vector<32x64xf32>
    %49 = arith.addf %47, %48 : vector<32x64xf32>
    %50 = vector.broadcast %4 : vector<32x1xf32> to vector<32x64xf32>
    %51 = arith.addf %49, %50 : vector<32x64xf32>
    %c0_25 = arith.constant 0 : index
    %c0_26 = arith.constant 0 : index
    %c0_27 = arith.constant 0 : index
    %52 = vector.load %arg7[%c0_25, %c0_26, %c0_27] : memref<1x32x64xf32, #tpu.memory_space<vmem>>, vector<1x32x64xf32>
    %53 = vector.shape_cast %52 : vector<1x32x64xf32> to vector<32x64xf32>
    %54 = vector.shape_cast %51 : vector<32x64xf32> to vector<1x32x64xf32>
    tpu.vector_store %arg7[%c0_25, %c0_26, %c0_27], %54 {strides = array<i32>} : memref<1x32x64xf32, #tpu.memory_space<vmem>>, vector<1x32x64xf32>,
    return
  }
  func.func @transform_0(%arg0: i32) -> (i32, i32, i32) {
    %c0_i32 = arith.constant 0 : i32
    %c0_i32_0 = arith.constant 0 : i32
    %c0_i32_1 = arith.constant 0 : i32
    return %arg0, %c0_i32, %c0_i32_0 : i32, i32, i32
  }
  func.func @transform_1(%arg0: i32) -> (i32, i32) {
    %c0_i32 = arith.constant 0 : i32
    %c0_i32_0 = arith.constant 0 : i32
    %c0_i32_1 = arith.constant 0 : i32
    return %c0_i32, %c0_i32_0 : i32, i32
  }
  func.func @transform_2(%arg0: i32) -> (i32, i32) {
    %c0_i32 = arith.constant 0 : i32
    %c0_i32_0 = arith.constant 0 : i32
    %c0_i32_1 = arith.constant 0 : i32
    return %c0_i32, %c0_i32_0 : i32, i32
  }
  func.func @transform_3(%arg0: i32) -> (i32, i32) {
    %c0_i32 = arith.constant 0 : i32
    %c0_i32_0 = arith.constant 0 : i32
    %c0_i32_1 = arith.constant 0 : i32
    return %c0_i32, %c0_i32_0 : i32, i32
  }
  func.func @transform_4(%arg0: i32) -> (i32, i32) {
    %c0_i32 = arith.constant 0 : i32
    %c0_i32_0 = arith.constant 0 : i32
    %c0_i32_1 = arith.constant 0 : i32
    return %c0_i32, %c0_i32_0 : i32, i32
  }
  func.func @transform_5(%arg0: i32) -> (i32, i32) {
    %c0_i32 = arith.constant 0 : i32
    %c0_i32_0 = arith.constant 0 : i32
    %c0_i32_1 = arith.constant 0 : i32
    return %c0_i32, %c0_i32_0 : i32, i32
  }
  func.func @transform_6(%arg0: i32) -> (i32, i32, i32) {
    %c0_i32 = arith.constant 0 : i32
    %c0_i32_0 = arith.constant 0 : i32
    %c0_i32_1 = arith.constant 0 : i32
    return %arg0, %c0_i32, %c0_i32_0 : i32, i32, i32
  }
}

</mosaic_0001>

<llo_original>
// kernel: shsa_forward.1
$region0: #{shsa_forward.1}
  #allocation0 [shape = 'u32[]', space=smem, size = 0x4, offset = 0x4, fixed_abs, tag = 'smem constant byte address 0x4 - core index']
  #allocation1 [shape = 'u32[144,128]{1,0:T(1,128)}', space=vmem, size = 0x12000, scoped, tag = 'internal scratch']
  %s0 = inlined_call_operand.vmem [shape: f32[2,32,64], index: 0, kind: input, shape index: {}]
  %s1 = inlined_call_operand.vmem [shape: f32[48,16], index: 1, kind: input, shape index: {}]
  %s2 = inlined_call_operand.vmem [shape: f32[48,1], index: 2, kind: input, shape index: {}]
  %s3 = inlined_call_operand.vmem [shape: f32[32,16], index: 3, kind: input, shape index: {}]
  %s4 = inlined_call_operand.vmem [shape: f32[32,16], index: 4, kind: input, shape index: {}]
  %s5 = inlined_call_operand.vmem [shape: f32[32,1], index: 5, kind: input, shape index: {}]
  %s6 = inlined_call_operand.vmem [shape: f32[2,32,64], index: 6, kind: output, shape index: {}]
  %s7 = sld [smem:[#allocation0]]
  $region57: #{shsa_forward.1} parent=0
    _
  %s9 = ssub.s32 1, %s7
  %s10 = scalar_select 0, %s9, %s7
  loop: start=0, step=1, limit=4
  $region2: #{shsa_forward.1} parent=0 // loop_pre_header
    _
  $region3: #{shsa_forward.1} parent=0 // loop_header
    %s12 = sphi 0, %s16
    %p13 = scmp.ge.s32.totalorder %s12, 4
    %s22 = sphi 0, %s24
    %s25 = sphi 0, %s22
    %s26 = sphi 0, %s25
    %s42 = sphi 0, %s26
    %s46 = sphi 0, %s46
    %s48 = sphi 0, %s46
    %s49 = sphi 0, %s48
    %s63 = sphi 0, %s49
    %s67 = sphi 0, %s67
    %s69 = sphi 0, %s67
    %s70 = sphi 0, %s69
    %s84 = sphi 0, %s70
    %s88 = sphi 0, %s88
    %s90 = sphi 0, %s88
    %s91 = sphi 0, %s90
    %s105 = sphi 0, %s91
    %s109 = sphi 0, %s109
    %s111 = sphi 0, %s109
    %s112 = sphi 0, %s111
    %s126 = sphi 0, %s112
    %s130 = sphi 0, %s130
    %s132 = sphi 0, %s130
    %s133 = sphi 0, %s132
    %s147 = sphi 0, %s133
    %s153 = sphi 0, %s155
    %s156 = sphi 0, %s153
    %s157 = sphi 0, %s156
    %s173 = sphi 0, %s157
  $region4: #{shsa_forward.1} parent=0 // loop_header_branch
    %15 = sbr.rel (%p13) target = $region8
  $region5: #{shsa_forward.1} parent=0 // loop_body
    %s17 = ssub.s32 %s12, 1
    %s18 = ssub.s32 %s12, 2
    %s19 = sadd.s32 %s12, 1
    %s20 = ssub.s32 %s12, %s19
    %p21 = scmp.eq.s32.totalorder %s20, 0
    %s23 = sadd.s32 %s22, 1
    %s24 = scalar_select %p21, %s22, %s23
    %p27 = pneg %p21
    %p28 = scmp.eq.s32.totalorder %s12, 1
    %p29 = por %p27, %p28
    %p30 = scmp.ne.s32.totalorder %s22, %s25
    %p31 = scmp.eq.s32.totalorder %s12, 0
    %p32 = por %p30, %p31
    %p33 = scmp.ne.s32.totalorder %s22, %s25
    %p34 = scmp.eq.s32.totalorder %s17, 1
    %p35 = por %p33, %p34
    %p36 = scmp.ne.s32.totalorder %s25, %s26
    %p37 = scmp.eq.s32.totalorder %s17, 0
    %p38 = por %p36, %p37
    %p39 = scmp.ne.s32.totalorder %s25, %s26
    %p40 = scmp.eq.s32.totalorder %s18, 1
    %p41 = por %p39, %p40
    %p43 = scmp.ne.s32.totalorder %s26, %s42
    %p44 = scmp.eq.s32.totalorder %s18, 0
    %p45 = por %p43, %p44
    %s47 = sadd.s32 %s46, 1
    %p50 = scmp.eq.s32.totalorder %s12, 1
    %p51 = scmp.ne.s32.totalorder %s46, %s48
    %p52 = scmp.eq.s32.totalorder %s12, 0
    %p53 = por %p51, %p52
    %p54 = scmp.ne.s32.totalorder %s46, %s48
    %p55 = scmp.eq.s32.totalorder %s17, 1
    %p56 = por %p54, %p55
    %p57 = scmp.ne.s32.totalorder %s48, %s49
    %p58 = scmp.eq.s32.totalorder %s17, 0
    %p59 = por %p57, %p58
    %p60 = scmp.ne.s32.totalorder %s48, %s49
    %p61 = scmp.eq.s32.totalorder %s18, 1
    %p62 = por %p60, %p61
    %p64 = scmp.ne.s32.totalorder %s49, %s63
    %p65 = scmp.eq.s32.totalorder %s18, 0
    %p66 = por %p64, %p65
    %s68 = sadd.s32 %s67, 1
    %p71 = scmp.eq.s32.totalorder %s12, 1
    %p72 = scmp.ne.s32.totalorder %s67, %s69
    %p73 = scmp.eq.s32.totalorder %s12, 0
    %p74 = por %p72, %p73
    %p75 = scmp.ne.s32.totalorder %s67, %s69
    %p76 = scmp.eq.s32.totalorder %s17, 1
    %p77 = por %p75, %p76
    %p78 = scmp.ne.s32.totalorder %s69, %s70
    %p79 = scmp.eq.s32.totalorder %s17, 0
    %p80 = por %p78, %p79
    %p81 = scmp.ne.s32.totalorder %s69, %s70
    %p82 = scmp.eq.s32.totalorder %s18, 1
    %p83 = por %p81, %p82
    %p85 = scmp.ne.s32.totalorder %s70, %s84
    %p86 = scmp.eq.s32.totalorder %s18, 0
    %p87 = por %p85, %p86
    %s89 = sadd.s32 %s88, 1
    %p92 = scmp.eq.s32.totalorder %s12, 1
    %p93 = scmp.ne.s32.totalorder %s88, %s90
    %p94 = scmp.eq.s32.totalorder %s12, 0
    %p95 = por %p93, %p94
    %p96 = scmp.ne.s32.totalorder %s88, %s90
    %p97 = scmp.eq.s32.totalorder %s17, 1
    %p98 = por %p96, %p97
    %p99 = scmp.ne.s32.totalorder %s90, %s91
    %p100 = scmp.eq.s32.totalorder %s17, 0
    %p101 = por %p99, %p100
    %p102 = scmp.ne.s32.totalorder %s90, %s91
    %p103 = scmp.eq.s32.totalorder %s18, 1
    %p104 = por %p102, %p103
    %p106 = scmp.ne.s32.totalorder %s91, %s105
    %p107 = scmp.eq.s32.totalorder %s18, 0
    %p108 = por %p106, %p107
    %s110 = sadd.s32 %s109, 1
    %p113 = scmp.eq.s32.totalorder %s12, 1
    %p114 = scmp.ne.s32.totalorder %s109, %s111
    %p115 = scmp.eq.s32.totalorder %s12, 0
    %p116 = por %p114, %p115
    %p117 = scmp.ne.s32.totalorder %s109, %s111
    %p118 = scmp.eq.s32.totalorder %s17, 1
    %p119 = por %p117, %p118
    %p120 = scmp.ne.s32.totalorder %s111, %s112
    %p121 = scmp.eq.s32.totalorder %s17, 0
    %p122 = por %p120, %p121
    %p123 = scmp.ne.s32.totalorder %s111, %s112
    %p124 = scmp.eq.s32.totalorder %s18, 1
    %p125 = por %p123, %p124
    %p127 = scmp.ne.s32.totalorder %s112, %s126
    %p128 = scmp.eq.s32.totalorder %s18, 0
    %p129 = por %p127, %p128
    %s131 = sadd.s32 %s130, 1
    %p134 = scmp.eq.s32.totalorder %s12, 1
    %p135 = scmp.ne.s32.totalorder %s130, %s132
    %p136 = scmp.eq.s32.totalorder %s12, 0
    %p137 = por %p135, %p136
    %p138 = scmp.ne.s32.totalorder %s130, %s132
    %p139 = scmp.eq.s32.totalorder %s17, 1
    %p140 = por %p138, %p139
    %p141 = scmp.ne.s32.totalorder %s132, %s133
    %p142 = scmp.eq.s32.totalorder %s17, 0
    %p143 = por %p141, %p142
    %p144 = scmp.ne.s32.totalorder %s132, %s133
    %p145 = scmp.eq.s32.totalorder %s18, 1
    %p146 = por %p144, %p145
    %p148 = scmp.ne.s32.totalorder %s133, %s147
    %p149 = scmp.eq.s32.totalorder %s18, 0
    %p150 = por %p148, %p149
    %s151 = ssub.s32 %s12, %s19
    %p152 = scmp.eq.s32.totalorder %s151, 0
    %s154 = sadd.s32 %s153, 1
    %s155 = scalar_select %p152, %s153, %s154
    %p158 = pneg %p152
    %p159 = scmp.eq.s32.totalorder %s12, 1
    %p160 = por %p158, %p159
    %p161 = scmp.ne.s32.totalorder %s153, %s156
    %p162 = scmp.eq.s32.totalorder %s12, 0
    %p163 = por %p161, %p162
    %p164 = scmp.ne.s32.totalorder %s153, %s156
    %p165 = scmp.eq.s32.totalorder %s17, 1
    %p166 = por %p164, %p165
    %p167 = scmp.ne.s32.totalorder %s156, %s157
    %p168 = scmp.eq.s32.totalorder %s17, 0
    %p169 = por %p167, %p168
    %p170 = scmp.ne.s32.totalorder %s156, %s157
    %p171 = scmp.eq.s32.totalorder %s18, 1
    %p172 = por %p170, %p171
    %p174 = scmp.ne.s32.totalorder %s157, %s173
    %p175 = scmp.eq.s32.totalorder %s18, 0
    %p176 = por %p174, %p175
    %p177 = scmp.le.s32.totalorder 1, %s12
    %p178 = scmp.lt.s32.totalorder %s12, 3
    %p179 = pnand %p177, %p178
    %p180 = pneg %p179
    // Predicated region
    $region9: #{shsa_forward.1} parent=5 // pred_check
      _
    $region10: #{shsa_forward.1} parent=5 // pred_check_branch
      %182 = sbr.rel (%p179) target = $region12
    $region11: #{shsa_forward.1} parent=5 // pred_region
      %s183 = ssub.s32 %s12, 1
      // Predicated region
      $region13: #{shsa_forward.1} parent=11 // pred_check
        %p184 = pneg %p59
      $region14: #{shsa_forward.1} parent=11 // pred_check_branch
        %186 = sbr.rel (%p184) target = $region16
      $region15: #{shsa_forward.1} parent=11 // pred_region
        _
      $region16: #{shsa_forward.1} parent=11 // pred_fallthru
        _
      // Predicated region
      $region17: #{shsa_forward.1} parent=11 // pred_check
        %p187 = pneg %p80
      $region18: #{shsa_forward.1} parent=11 // pred_check_branch
        %189 = sbr.rel (%p187) target = $region20
      $region19: #{shsa_forward.1} parent=11 // pred_region
        _
      $region20: #{shsa_forward.1} parent=11 // pred_fallthru
        _
      // Predicated region
      $region21: #{shsa_forward.1} parent=11 // pred_check
        %p190 = pneg %p101
      $region22: #{shsa_forward.1} parent=11 // pred_check_branch
        %192 = sbr.rel (%p190) target = $region24
      $region23: #{shsa_forward.1} parent=11 // pred_region
        _
      $region24: #{shsa_forward.1} parent=11 // pred_fallthru
        _
      // Predicated region
      $region25: #{shsa_forward.1} parent=11 // pred_check
        %p193 = pneg %p122
      $region26: #{shsa_forward.1} parent=11 // pred_check_branch
        %195 = sbr.rel (%p193) target = $region28
      $region27: #{shsa_forward.1} parent=11 // pred_region
        _
      $region28: #{shsa_forward.1} parent=11 // pred_fallthru
        _
      // Predicated region
      $region29: #{shsa_forward.1} parent=11 // pred_check
        %p196 = pneg %p143
      $region30: #{shsa_forward.1} parent=11 // pred_check_branch
        %198 = sbr.rel (%p196) target = $region32
      $region31: #{shsa_forward.1} parent=11 // pred_region
        _
      $region32: #{shsa_forward.1} parent=11 // pred_fallthru
        _
    $region12: #{shsa_forward.1} parent=5 // pred_fallthru
      _
    %p199 = scmp.lt.s32.totalorder %s12, 2
    // Predicated region
    $region33: #{shsa_forward.1} parent=5 // pred_check
      %p200 = pneg %p199
    $region34: #{shsa_forward.1} parent=5 // pred_check_branch
      %202 = sbr.rel (%p200) target = $region36
    $region35: #{shsa_forward.1} parent=5 // pred_region
      // Predicated region
      $region37: #{shsa_forward.1} parent=35 // pred_check
        %p203 = pneg %p32
      $region38: #{shsa_forward.1} parent=35 // pred_check_branch
        %205 = sbr.rel (%p203) target = $region40
      $region39: #{shsa_forward.1} parent=35 // pred_region
        %p206 = scmp.lt.s32.totalorder %s12, 1
        %s207 = scalar_select %p206, %s12, 1
        %s208 = smul.addr %s207, 4
        %s209 = smul.addr %s208, 8
        %s210 = scalar_lea.vmem %s0, %s209
      $region40: #{shsa_forward.1} parent=35 // pred_fallthru
        _
    $region36: #{shsa_forward.1} parent=5 // pred_fallthru
      _
    %p211 = scmp.le.s32.totalorder 1, %s12
    %p212 = scmp.lt.s32.totalorder %s12, 3
    %p213 = pnand %p211, %p212
    %p214 = pneg %p213
    // Predicated region
    $region41: #{shsa_forward.1} parent=5 // pred_check
      _
    $region42: #{shsa_forward.1} parent=5 // pred_check_branch
      %216 = sbr.rel (%p213) target = $region44
    $region43: #{shsa_forward.1} parent=5 // pred_region
      %s217 = ssub.s32 %s12, 1
      %p218 = scmp.lt.s32.totalorder %s17, 1
      %s219 = scalar_select %p218, %s17, 1
      %s220 = smul.addr %s219, 4
      %s221 = smul.addr %s220, 8
      %s222 = scalar_lea.vmem %s0, %s221
      %p223 = pneg %p38
      %p224 = pneg %p35
      %p225 = pneg %p59
      %p226 = pneg %p56
      %p227 = pneg %p80
      %p228 = pneg %p77
      %p229 = pneg %p101
      %p230 = pneg %p98
      %p231 = pneg %p122
      %p232 = pneg %p119
      %p233 = pneg %p143
      %p234 = pneg %p140
      %p235 = pneg %p169
      %p236 = pneg %p166
      %p237 = scmp.lt.s32.totalorder %s17, 1
      %s238 = scalar_select %p237, %s17, 1
      %s239 = smul.addr %s238, 4
      %s240 = smul.addr %s239, 8
      %s241 = scalar_lea.vmem %s6, %s240
      %p242 = scmp.lt.s32.totalorder %s17, 1
      %s243 = scalar_select %p242, %s17, 1
      %s244 = smul.addr %s243, 4
      %s245 = smul.addr %s244, 8
      %s246 = scalar_lea.vmem %s0, %s245
      %p247 = scmp.lt.s32.totalorder %s17, 1
      %s248 = scalar_select %p247, %s17, 1
      %s249 = smul.addr %s248, 4
      %s250 = smul.addr %s249, 8
      %s251 = scalar_lea.vmem %s6, %s250
      %v252 = vld [vmem:[%s1] sm:$0xff]
      %v253 = vld [vmem:[%s1 + $0x8] sm:$0xff]
      %v254 = vld [vmem:[%s1 + $0x10] sm:$0xff]
      %v255 = vld [vmem:[%s1 + $0x18] sm:$0xff]
      %v256 = vld [vmem:[%s1 + $0x20] sm:$0xff]
      %v257 = vld [vmem:[%s1 + $0x28] sm:$0xff]
      %v258 = vld [vmem:[%s2] sm:$0xff]
      %v259 = vld [vmem:[%s2 + $0x8] sm:$0xff]
      %v260 = vld [vmem:[%s2 + $0x10] sm:$0xff]
      %v261 = vld [vmem:[%s2 + $0x18] sm:$0xff]
      %v262 = vld [vmem:[%s2 + $0x20] sm:$0xff]
      %v263 = vld [vmem:[%s2 + $0x28] sm:$0xff]
      %v264 = vld [vmem:[%s3] sm:$0xff]
      %v265 = vld [vmem:[%s3 + $0x8] sm:$0xff]
      %v266 = vld [vmem:[%s3 + $0x10] sm:$0xff]
      %v267 = vld [vmem:[%s3 + $0x18] sm:$0xff]
      %v268 = vld [vmem:[%s4] sm:$0xff]
      %v269 = vld [vmem:[%s4 + $0x8] sm:$0xff]
      %v270 = vld [vmem:[%s4 + $0x10] sm:$0xff]
      %v271 = vld [vmem:[%s4 + $0x18] sm:$0xff]
      %v272 = vld [vmem:[%s5] sm:$0xff]
      %v273 = vld [vmem:[%s5 + $0x8] sm:$0xff]
      %v274 = vld [vmem:[%s5 + $0x10] sm:$0xff]
      %v275 = vld [vmem:[%s5 + $0x18] sm:$0xff]
      %v276 = vld [vmem:[%s246] sm:$0xff]
      %v277 = vld [vmem:[%s246 + $0x8] sm:$0xff]
      %v278 = vld [vmem:[%s246 + $0x10] sm:$0xff]
      %v279 = vld [vmem:[%s246 + $0x18] sm:$0xff]
      %vm280 = vcmask 523264
      %v281 = vsel %vm280, %v276, 0.0
      %v282 = vsel %vm280, %v277, 0.0
      %v283 = vadd.f32 %v281, %v282
      %284 = vadd.xlane.f32.xlu0 %v283
      %v285 = vpop.xlane.xlu0 %284
      %v286 = vrot.slane %v285, 4
      %v287 = vadd.f32 %v285, %v286
      %v288 = vrot.slane %v287, 2
      %v289 = vadd.f32 %v287, %v288
      %v290 = vrot.slane %v289, 1
      %v291 = vadd.f32 %v289, %v290
      %s292 = vtos %v291
      %v293 = vrcp.pop 1024.0
      %s294 = vtos %v293
      %s295 = smul.f32 %s292, %s294
      %v296 = vstv %s295
      %v297 = vsub.f32 %v276, %v296
      %v298 = vsub.f32 %v277, %v296
      %v299 = vmul.f32 %v297, %v297
      %v300 = vmul.f32 %v298, %v298
      %v301 = vsel %vm280, %v299, 0.0
      %v302 = vsel %vm280, %v300, 0.0
      %v303 = vadd.f32 %v301, %v302
      %304 = vadd.xlane.f32.xlu0 %v303
      %v305 = vpop.xlane.xlu0 %304
      %v306 = vrot.slane %v305, 4
      %v307 = vadd.f32 %v305, %v306
      %v308 = vrot.slane %v307, 2
      %v309 = vadd.f32 %v307, %v308
      %v310 = vrot.slane %v309, 1
      %v311 = vadd.f32 %v309, %v310
      %s312 = vtos %v311
      %v313 = vrcp.pop 1024.0
      %s314 = vtos %v313
      %s315 = smul.f32 %s312, %s314
      %s316 = sadd.f32 %s315, 1e-05
      %v317 = vstv %s316
      %v318 = vrsqrt.pop %v317
      %s319 = vtos %v318
      %v320 = vstv %s319
      %v321 = vmul.f32 %v297, %v320
      %v322 = vmul.f32 %v298, %v320
      %324 = vset.pattern.permute.xlu0 0
      %325 = vperm.xlu0 %324, %v258
      %v326 = vpop.permute.xlu0 %325
      %329 = vset.pattern.permute.xlu0 0
      %330 = vperm.xlu0 %329, %v259
      %v331 = vpop.permute.xlu0 %330
      %334 = vset.pattern.permute.xlu0 0
      %335 = vperm.xlu0 %334, %v260
      %v336 = vpop.permute.xlu0 %335
      %339 = vset.pattern.permute.xlu0 0
      %340 = vperm.xlu0 %339, %v261
      %v341 = vpop.permute.xlu0 %340
      %344 = vset.pattern.permute.xlu0 0
      %345 = vperm.xlu0 %344, %v262
      %v346 = vpop.permute.xlu0 %345
      %349 = vset.pattern.permute.xlu0 0
      %350 = vperm.xlu0 %349, %v263
      %v351 = vpop.permute.xlu0 %350
      %vm353 = vcmask 130048
      %v355 = vsel %vm353, %v252, 0
      %v358 = vsel %vm353, %v253, 0
      %v361 = vsel %vm353, %v254, 0
      %v364 = vsel %vm353, %v255, 0
      %v367 = vsel %vm353, %v256, 0
      %v370 = vsel %vm353, %v257, 0
      %372 = vmatprep.subr.mxu0 0.0
      %373 = vmatpush1.msra.mxu0 0.0
      %374 = vmatprep.subr.mxu0 0.0
      %375 = vmatpush1.msra.mxu0 0.0
      %376 = vmatprep.subr.mxu0 0.0
      %377 = vmatpush1.msra.mxu0 0.0
      %378 = vmatprep.subr.mxu0 0.0
      %379 = vmatpush1.msra.mxu0 0.0
      %380 = vmatprep.subr.mxu0 0.0
      %381 = vmatpush1.msra.mxu0 0.0
      %382 = vmatprep.subr.mxu0 0.0
      %383 = vmatpush1.msra.mxu0 0.0
      %384 = vmatprep.subr.mxu0 0.0
      %385 = vmatpush1.msra.mxu0 0.0
      %386 = vmatprep.subr.mxu0 0.0
      %387 = vmatpush1.msra.mxu0 0.0
      %388 = vmatprep.subr.mxu0 0.0
      %389 = vmatpush1.msra.mxu0 0.0
      %390 = vmatprep.subr.mxu0 0.0
      %391 = vmatpush1.msra.mxu0 0.0
      %392 = vmatprep.subr.mxu0 0.0
      %393 = vmatpush1.msra.mxu0 0.0
      %394 = vmatprep.subr.mxu0 0.0
      %395 = vmatpush1.msra.mxu0 0.0
      %396 = vmatprep.subr.mxu0 0.0
      %397 = vmatpush1.msra.mxu0 0.0
      %398 = vmatprep.subr.mxu0 0.0
      %399 = vmatpush1.msra.mxu0 0.0
      %400 = vmatprep.subr.mxu0 0.0
      %401 = vmatpush1.msra.mxu0 %v322
      %402 = vmatprep.subr.mxu0 0.0
      %403 = vmatpush1.msra.mxu0 %v321
      %404 = vmatprep.subr.mxu0 0.0
      %405 = vmatpush2.msra.mxu0 0.0
      %406 = vmatprep.subr.mxu0 0.0
      %407 = vmatpush2.msra.mxu0 0.0
      %408 = vmatprep.subr.mxu0 0.0
      %409 = vmatpush2.msra.mxu0 0.0
      %410 = vmatprep.subr.mxu0 0.0
      %411 = vmatpush2.msra.mxu0 0.0
      %412 = vmatprep.subr.mxu0 0.0
      %413 = vmatpush2.msra.mxu0 0.0
      %414 = vmatprep.subr.mxu0 0.0
      %415 = vmatpush2.msra.mxu0 0.0
      %416 = vmatprep.subr.mxu0 0.0
      %417 = vmatpush2.msra.mxu0 0.0
      %418 = vmatprep.subr.mxu0 0.0
      %419 = vmatpush2.msra.mxu0 0.0
      %420 = vmatprep.subr.mxu0 0.0
      %421 = vmatpush2.msra.mxu0 0.0
      %422 = vmatprep.subr.mxu0 0.0
      %423 = vmatpush2.msra.mxu0 0.0
      %424 = vmatprep.subr.mxu0 0.0
      %425 = vmatpush2.msra.mxu0 0.0
      %426 = vmatprep.subr.mxu0 0.0
      %427 = vmatpush2.msra.mxu0 0.0
      %428 = vmatprep.subr.mxu0 0.0
      %429 = vmatpush2.msra.mxu0 0.0
      %430 = vmatprep.subr.mxu0 0.0
      %431 = vmatpush2.msra.mxu0 0.0
      %432 = vmatprep.subr.mxu0 0.0
      %433 = vmatpush2.msra.mxu0 0.0
      %434 = vmatprep.subr.mxu0 0.0
      %435 = vmatpush2.msra.mxu0 0.0
      %436 = vmatprep.mubr.f32.mxu0 0.0
      %437 = vmatmul.mubr.f32.gmra.mxu0 %v355
      %v438 = vpop.f32.mrf.mxu0
      %v439 = vadd.f32 %v326, %v438
      %v440 = vpop.f32.mrf.mxu0
      %441 = vmatprep.mubr.f32.mxu0 0.0
      %442 = vmatmul.mubr.f32.gmra.mxu0 %v358
      %v443 = vpop.f32.mrf.mxu0
      %v444 = vadd.f32 %v331, %v443
      %v445 = vpop.f32.mrf.mxu0
      %446 = vmatprep.mubr.f32.mxu0 0.0
      %447 = vmatmul.mubr.f32.gmra.mxu0 %v361
      %v448 = vpop.f32.mrf.mxu0
      %v449 = vadd.f32 %v336, %v448
      %v450 = vpop.f32.mrf.mxu0
      %451 = vmatprep.mubr.f32.mxu0 0.0
      %452 = vmatmul.mubr.f32.gmra.mxu0 %v364
      %v453 = vpop.f32.mrf.mxu0
      %v454 = vadd.f32 %v341, %v453
      %v455 = vpop.f32.mrf.mxu0
      %456 = vmatprep.mubr.f32.mxu0 0.0
      %457 = vmatmul.mubr.f32.gmra.mxu0 %v367
      %v458 = vpop.f32.mrf.mxu0
      %v459 = vadd.f32 %v346, %v458
      %v460 = vpop.f32.mrf.mxu0
      %461 = vmatprep.mubr.f32.mxu0 0.0
      %462 = vmatmul.mubr.f32.gmra.mxu0 %v370
      %v463 = vpop.f32.mrf.mxu0
      %v464 = vadd.f32 %v351, %v463
      %v465 = vpop.f32.mrf.mxu0
      %466 = vdwg.mxu0
      %467 = vxpose.xlu0.b32.start [1/16] %v439, 128
      %468 = vxpose.xlu0.b32.cont [2/16] %v444, 128
      %469 = vxpose.xlu0.b32.cont [3/16] 0.0, 128
      %470 = vxpose.xlu0.b32.cont [4/16] 0.0, 128
      %471 = vxpose.xlu0.b32.cont [5/16] 0.0, 128
      %472 = vxpose.xlu0.b32.cont [6/16] 0.0, 128
      %473 = vxpose.xlu0.b32.cont [7/16] 0.0, 128
      %474 = vxpose.xlu0.b32.cont [8/16] 0.0, 128
      %475 = vxpose.xlu0.b32.cont [9/16] 0.0, 128
      %476 = vxpose.xlu0.b32.cont [10/16] 0.0, 128
      %477 = vxpose.xlu0.b32.cont [11/16] 0.0, 128
      %478 = vxpose.xlu0.b32.cont [12/16] 0.0, 128
      %479 = vxpose.xlu0.b32.cont [13/16] 0.0, 128
      %480 = vxpose.xlu0.b32.cont [14/16] 0.0, 128
      %481 = vxpose.xlu0.b32.cont [15/16] 0.0, 128
      %482 = vxpose.xlu0.b32.end [16/16] 0.0, 128
      %v483 = vpop.trf.xlu0
      %v484 = vpop.trf.xlu0
      %v485 = vpop.trf.xlu0
      %v486 = vpop.trf.xlu0
      %v487 = vpop.trf.xlu0
      %v488 = vpop.trf.xlu0
      %v489 = vpop.trf.xlu0
      %v490 = vpop.trf.xlu0
      %v491 = vpop.trf.xlu0
      %v492 = vpop.trf.xlu0
      %v493 = vpop.trf.xlu0
      %v494 = vpop.trf.xlu0
      %v495 = vpop.trf.xlu0
      %v496 = vpop.trf.xlu0
      %v497 = vpop.trf.xlu0
      %v498 = vpop.trf.xlu0
      %v500 = vsel %vm353, %v483, 0
      %v503 = vsel %vm353, %v484, 0
      %v506 = vsel %vm353, %v485, 0
      %v509 = vsel %vm353, %v486, 0
      %v512 = vsel %vm353, %v487, 0
      %v515 = vsel %vm353, %v488, 0
      %v518 = vsel %vm353, %v489, 0
      %v521 = vsel %vm353, %v490, 0
      %523 = vmatprep.subr.mxu0 0.0
      %524 = vmatpush1.msra.mxu0 0.0
      %525 = vmatprep.subr.mxu0 0.0
      %526 = vmatpush1.msra.mxu0 0.0
      %527 = vmatprep.subr.mxu0 0.0
      %528 = vmatpush1.msra.mxu0 0.0
      %529 = vmatprep.subr.mxu0 0.0
      %530 = vmatpush1.msra.mxu0 0.0
      %531 = vmatprep.subr.mxu0 0.0
      %532 = vmatpush1.msra.mxu0 0.0
      %533 = vmatprep.subr.mxu0 0.0
      %534 = vmatpush1.msra.mxu0 0.0
      %535 = vmatprep.subr.mxu0 0.0
      %536 = vmatpush1.msra.mxu0 0.0
      %537 = vmatprep.subr.mxu0 0.0
      %538 = vmatpush1.msra.mxu0 0.0
      %539 = vmatprep.subr.mxu0 0.0
      %540 = vmatpush1.msra.mxu0 0.0
      %541 = vmatprep.subr.mxu0 0.0
      %542 = vmatpush1.msra.mxu0 0.0
      %543 = vmatprep.subr.mxu0 0.0
      %544 = vmatpush1.msra.mxu0 0.0
      %545 = vmatprep.subr.mxu0 0.0
      %546 = vmatpush1.msra.mxu0 0.0
      %547 = vmatprep.subr.mxu0 0.0
      %548 = vmatpush1.msra.mxu0 0.0
      %549 = vmatprep.subr.mxu0 0.0
      %550 = vmatpush1.msra.mxu0 0.0
      %551 = vmatprep.subr.mxu0 0.0
      %552 = vmatpush1.msra.mxu0 %v454
      %553 = vmatprep.subr.mxu0 0.0
      %554 = vmatpush1.msra.mxu0 %v449
      %555 = vmatprep.subr.mxu0 0.0
      %556 = vmatpush2.msra.mxu0 0.0
      %557 = vmatprep.subr.mxu0 0.0
      %558 = vmatpush2.msra.mxu0 0.0
      %559 = vmatprep.subr.mxu0 0.0
      %560 = vmatpush2.msra.mxu0 0.0
      %561 = vmatprep.subr.mxu0 0.0
      %562 = vmatpush2.msra.mxu0 0.0
      %563 = vmatprep.subr.mxu0 0.0
      %564 = vmatpush2.msra.mxu0 0.0
      %565 = vmatprep.subr.mxu0 0.0
      %566 = vmatpush2.msra.mxu0 0.0
      %567 = vmatprep.subr.mxu0 0.0
      %568 = vmatpush2.msra.mxu0 0.0
      %569 = vmatprep.subr.mxu0 0.0
      %570 = vmatpush2.msra.mxu0 0.0
      %571 = vmatprep.subr.mxu0 0.0
      %572 = vmatpush2.msra.mxu0 0.0
      %573 = vmatprep.subr.mxu0 0.0
      %574 = vmatpush2.msra.mxu0 0.0
      %575 = vmatprep.subr.mxu0 0.0
      %576 = vmatpush2.msra.mxu0 0.0
      %577 = vmatprep.subr.mxu0 0.0
      %578 = vmatpush2.msra.mxu0 0.0
      %579 = vmatprep.subr.mxu0 0.0
      %580 = vmatpush2.msra.mxu0 0.0
      %581 = vmatprep.subr.mxu0 0.0
      %582 = vmatpush2.msra.mxu0 0.0
      %583 = vmatprep.subr.mxu0 0.0
      %584 = vmatpush2.msra.mxu0 0.0
      %585 = vmatprep.subr.mxu0 0.0
      %586 = vmatpush2.msra.mxu0 0.0
      %587 = vmatprep.mubr.f32.mxu0 0.0
      %588 = vmatmul.mubr.f32.gmra.mxu0 %v500
      %v589 = vpop.f32.mrf.mxu0
      %v590 = vadd.f32 0.0, %v589
      %v591 = vpop.f32.mrf.mxu0
      %592 = vmatprep.mubr.f32.mxu0 0.0
      %593 = vmatmul.mubr.f32.gmra.mxu0 %v503
      %v594 = vpop.f32.mrf.mxu0
      %v595 = vadd.f32 0.0, %v594
      %v596 = vpop.f32.mrf.mxu0
      %597 = vmatprep.mubr.f32.mxu0 0.0
      %598 = vmatmul.mubr.f32.gmra.mxu0 %v506
      %v599 = vpop.f32.mrf.mxu0
      %v600 = vadd.f32 0.0, %v599
      %v601 = vpop.f32.mrf.mxu0
      %602 = vmatprep.mubr.f32.mxu0 0.0
      %603 = vmatmul.mubr.f32.gmra.mxu0 %v509
      %v604 = vpop.f32.mrf.mxu0
      %v605 = vadd.f32 0.0, %v604
      %v606 = vpop.f32.mrf.mxu0
      %607 = vmatprep.mubr.f32.mxu0 0.0
      %608 = vmatmul.mubr.f32.gmra.mxu0 %v512
      %v609 = vpop.f32.mrf.mxu0
      %v610 = vadd.f32 0.0, %v609
      %v611 = vpop.f32.mrf.mxu0
      %612 = vmatprep.mubr.f32.mxu0 0.0
      %613 = vmatmul.mubr.f32.gmra.mxu0 %v515
      %v614 = vpop.f32.mrf.mxu0
      %v615 = vadd.f32 0.0, %v614
      %v616 = vpop.f32.mrf.mxu0
      %617 = vmatprep.mubr.f32.mxu0 0.0
      %618 = vmatmul.mubr.f32.gmra.mxu0 %v518
      %v619 = vpop.f32.mrf.mxu0
      %v620 = vadd.f32 0.0, %v619
      %v621 = vpop.f32.mrf.mxu0
      %622 = vmatprep.mubr.f32.mxu0 0.0
      %623 = vmatmul.mubr.f32.gmra.mxu0 %v521
      %v624 = vpop.f32.mrf.mxu0
      %v625 = vadd.f32 0.0, %v624
      %v626 = vpop.f32.mrf.mxu0
      %627 = vdwg.mxu0
      %v628 = vsel %vm280, %v590, -inf
      %629 = vmax.xlane.f32.xlu0 %v628
      %v630 = vpop.xlane.xlu0 %629
      %v631 = vsel %vm280, %v595, -inf
      %632 = vmax.xlane.f32.xlu0 %v631
      %v633 = vpop.xlane.xlu0 %632
      %v634 = vsel %vm280, %v600, -inf
      %635 = vmax.xlane.f32.xlu0 %v634
      %v636 = vpop.xlane.xlu0 %635
      %v637 = vsel %vm280, %v605, -inf
      %638 = vmax.xlane.f32.xlu0 %v637
      %v639 = vpop.xlane.xlu0 %638
      %v640 = vsel %vm280, %v610, -inf
      %641 = vmax.xlane.f32.xlu0 %v640
      %v642 = vpop.xlane.xlu0 %641
      %v643 = vsel %vm280, %v615, -inf
      %644 = vmax.xlane.f32.xlu0 %v643
      %v645 = vpop.xlane.xlu0 %644
      %v646 = vsel %vm280, %v620, -inf
      %647 = vmax.xlane.f32.xlu0 %v646
      %v648 = vpop.xlane.xlu0 %647
      %v649 = vsel %vm280, %v625, -inf
      %650 = vmax.xlane.f32.xlu0 %v649
      %v651 = vpop.xlane.xlu0 %650
      %v652 = vsub.f32 %v590, %v630
      %v653 = vsub.f32 %v595, %v633
      %v654 = vsub.f32 %v600, %v636
      %v655 = vsub.f32 %v605, %v639
      %v656 = vsub.f32 %v610, %v642
      %v657 = vsub.f32 %v615, %v645
      %v658 = vsub.f32 %v620, %v648
      %v659 = vsub.f32 %v625, %v651
      %v660 = vmul.f32 %v652, 1.442695
      %v661 = vpow.pop %v660
      %v662 = vmul.f32 %v653, 1.442695
      %v663 = vpow.pop %v662
      %v664 = vmul.f32 %v654, 1.442695
      %v665 = vpow.pop %v664
      %v666 = vmul.f32 %v655, 1.442695
      %v667 = vpow.pop %v666
      %v668 = vmul.f32 %v656, 1.442695
      %v669 = vpow.pop %v668
      %v670 = vmul.f32 %v657, 1.442695
      %v671 = vpow.pop %v670
      %v672 = vmul.f32 %v658, 1.442695
      %v673 = vpow.pop %v672
      %v674 = vmul.f32 %v659, 1.442695
      %v675 = vpow.pop %v674
      %v676 = vsel %vm280, %v661, 0.0
      %677 = vadd.xlane.f32.xlu0 %v676
      %v678 = vpop.xlane.xlu0 %677
      %v679 = vsel %vm280, %v663, 0.0
      %680 = vadd.xlane.f32.xlu0 %v679
      %v681 = vpop.xlane.xlu0 %680
      %v682 = vsel %vm280, %v665, 0.0
      %683 = vadd.xlane.f32.xlu0 %v682
      %v684 = vpop.xlane.xlu0 %683
      %v685 = vsel %vm280, %v667, 0.0
      %686 = vadd.xlane.f32.xlu0 %v685
      %v687 = vpop.xlane.xlu0 %686
      %v688 = vsel %vm280, %v669, 0.0
      %689 = vadd.xlane.f32.xlu0 %v688
      %v690 = vpop.xlane.xlu0 %689
      %v691 = vsel %vm280, %v671, 0.0
      %692 = vadd.xlane.f32.xlu0 %v691
      %v693 = vpop.xlane.xlu0 %692
      %v694 = vsel %vm280, %v673, 0.0
      %695 = vadd.xlane.f32.xlu0 %v694
      %v696 = vpop.xlane.xlu0 %695
      %v697 = vsel %vm280, %v675, 0.0
      %698 = vadd.xlane.f32.xlu0 %v697
      %v699 = vpop.xlane.xlu0 %698
      %v700 = vrcp.pop %v678
      %v701 = vmul.f32 %v661, %v700
      %v702 = vrcp.pop %v681
      %v703 = vmul.f32 %v663, %v702
      %v704 = vrcp.pop %v684
      %v705 = vmul.f32 %v665, %v704
      %v706 = vrcp.pop %v687
      %v707 = vmul.f32 %v667, %v706
      %v708 = vrcp.pop %v690
      %v709 = vmul.f32 %v669, %v708
      %v710 = vrcp.pop %v693
      %v711 = vmul.f32 %v671, %v710
      %v712 = vrcp.pop %v696
      %v713 = vmul.f32 %v673, %v712
      %v714 = vrcp.pop %v699
      %v715 = vmul.f32 %v675, %v714
      %v717 = vsel %vm280, %v459, 0
      %v720 = vsel %vm280, %v464, 0
      %v723 = vsel %vm280, %v701, 0
      %v726 = vsel %vm280, %v703, 0
      %v729 = vsel %vm280, %v705, 0
      %v732 = vsel %vm280, %v707, 0
      %v735 = vsel %vm280, %v709, 0
      %v738 = vsel %vm280, %v711, 0
      %v741 = vsel %vm280, %v713, 0
      %v744 = vsel %vm280, %v715, 0
      %746 = vmatprep.subr.mxu0 0.0
      %747 = vmatpush1.xpose.msra.mxu0 0.0
      %748 = vmatprep.subr.mxu0 0.0
      %749 = vmatpush1.xpose.msra.mxu0 0.0
      %750 = vmatprep.subr.mxu0 0.0
      %751 = vmatpush1.xpose.msra.mxu0 0.0
      %752 = vmatprep.subr.mxu0 0.0
      %753 = vmatpush1.xpose.msra.mxu0 0.0
      %754 = vmatprep.subr.mxu0 0.0
      %755 = vmatpush1.xpose.msra.mxu0 0.0
      %756 = vmatprep.subr.mxu0 0.0
      %757 = vmatpush1.xpose.msra.mxu0 0.0
      %758 = vmatprep.subr.mxu0 0.0
      %759 = vmatpush1.xpose.msra.mxu0 0.0
      %760 = vmatprep.subr.mxu0 0.0
      %761 = vmatpush1.xpose.msra.mxu0 0.0
      %762 = vmatprep.subr.mxu0 0.0
      %763 = vmatpush1.xpose.msra.mxu0 %v744
      %764 = vmatprep.subr.mxu0 0.0
      %765 = vmatpush1.xpose.msra.mxu0 %v741
      %766 = vmatprep.subr.mxu0 0.0
      %767 = vmatpush1.xpose.msra.mxu0 %v738
      %768 = vmatprep.subr.mxu0 0.0
      %769 = vmatpush1.xpose.msra.mxu0 %v735
      %770 = vmatprep.subr.mxu0 0.0
      %771 = vmatpush1.xpose.msra.mxu0 %v732
      %772 = vmatprep.subr.mxu0 0.0
      %773 = vmatpush1.xpose.msra.mxu0 %v729
      %774 = vmatprep.subr.mxu0 0.0
      %775 = vmatpush1.xpose.msra.mxu0 %v726
      %776 = vmatprep.subr.mxu0 0.0
      %777 = vmatpush1.xpose.msra.mxu0 %v723
      %778 = vmatprep.subr.mxu0 0.0
      %779 = vmatpush2.xpose.msra.mxu0 0.0
      %780 = vmatprep.subr.mxu0 0.0
      %781 = vmatpush2.xpose.msra.mxu0 0.0
      %782 = vmatprep.subr.mxu0 0.0
      %783 = vmatpush2.xpose.msra.mxu0 0.0
      %784 = vmatprep.subr.mxu0 0.0
      %785 = vmatpush2.xpose.msra.mxu0 0.0
      %786 = vmatprep.subr.mxu0 0.0
      %787 = vmatpush2.xpose.msra.mxu0 0.0
      %788 = vmatprep.subr.mxu0 0.0
      %789 = vmatpush2.xpose.msra.mxu0 0.0
      %790 = vmatprep.subr.mxu0 0.0
      %791 = vmatpush2.xpose.msra.mxu0 0.0
      %792 = vmatprep.subr.mxu0 0.0
      %793 = vmatpush2.xpose.msra.mxu0 0.0
      %794 = vmatprep.subr.mxu0 0.0
      %795 = vmatpush2.xpose.msra.mxu0 0.0
      %796 = vmatprep.subr.mxu0 0.0
      %797 = vmatpush2.xpose.msra.mxu0 0.0
      %798 = vmatprep.subr.mxu0 0.0
      %799 = vmatpush2.xpose.msra.mxu0 0.0
      %800 = vmatprep.subr.mxu0 0.0
      %801 = vmatpush2.xpose.msra.mxu0 0.0
      %802 = vmatprep.subr.mxu0 0.0
      %803 = vmatpush2.xpose.msra.mxu0 0.0
      %804 = vmatprep.subr.mxu0 0.0
      %805 = vmatpush2.xpose.msra.mxu0 0.0
      %806 = vmatprep.subr.mxu0 0.0
      %807 = vmatpush2.xpose.msra.mxu0 0.0
      %808 = vmatprep.subr.mxu0 0.0
      %809 = vmatpush2.xpose.msra.mxu0 0.0
      %810 = vmatprep.mubr.f32.mxu0 0.0
      %811 = vmatmul.mubr.f32.gmra.mxu0 %v717
      %v812 = vpop.f32.mrf.mxu0
      %v813 = vadd.f32 0.0, %v812
      %v814 = vpop.f32.mrf.mxu0
      %815 = vmatprep.mubr.f32.mxu0 0.0
      %816 = vmatmul.mubr.f32.gmra.mxu0 %v720
      %v817 = vpop.f32.mrf.mxu0
      %v818 = vadd.f32 0.0, %v817
      %v819 = vpop.f32.mrf.mxu0
      %820 = vdwg.mxu0
      %v821 = vmax.f32 %v813, 0.0
      %v822 = vmax.f32 %v818, 0.0
      %v823 = vmax.f32 %v278, 0.0
      %v824 = vmax.f32 %v279, 0.0
      %v826 = vsel %vm353, %v268, 0
      %v829 = vsel %vm353, %v269, 0
      %v832 = vsel %vm353, %v270, 0
      %v835 = vsel %vm353, %v271, 0
      %837 = vmatprep.subr.mxu0 0.0
      %838 = vmatpush1.msra.mxu0 0.0
      %839 = vmatprep.subr.mxu0 0.0
      %840 = vmatpush1.msra.mxu0 0.0
      %841 = vmatprep.subr.mxu0 0.0
      %842 = vmatpush1.msra.mxu0 0.0
      %843 = vmatprep.subr.mxu0 0.0
      %844 = vmatpush1.msra.mxu0 0.0
      %845 = vmatprep.subr.mxu0 0.0
      %846 = vmatpush1.msra.mxu0 0.0
      %847 = vmatprep.subr.mxu0 0.0
      %848 = vmatpush1.msra.mxu0 0.0
      %849 = vmatprep.subr.mxu0 0.0
      %850 = vmatpush1.msra.mxu0 0.0
      %851 = vmatprep.subr.mxu0 0.0
      %852 = vmatpush1.msra.mxu0 0.0
      %853 = vmatprep.subr.mxu0 0.0
      %854 = vmatpush1.msra.mxu0 0.0
      %855 = vmatprep.subr.mxu0 0.0
      %856 = vmatpush1.msra.mxu0 0.0
      %857 = vmatprep.subr.mxu0 0.0
      %858 = vmatpush1.msra.mxu0 0.0
      %859 = vmatprep.subr.mxu0 0.0
      %860 = vmatpush1.msra.mxu0 0.0
      %861 = vmatprep.subr.mxu0 0.0
      %862 = vmatpush1.msra.mxu0 0.0
      %863 = vmatprep.subr.mxu0 0.0
      %864 = vmatpush1.msra.mxu0 0.0
      %865 = vmatprep.subr.mxu0 0.0
      %866 = vmatpush1.msra.mxu0 %v824
      %867 = vmatprep.subr.mxu0 0.0
      %868 = vmatpush1.msra.mxu0 %v823
      %869 = vmatprep.subr.mxu0 0.0
      %870 = vmatpush2.msra.mxu0 0.0
      %871 = vmatprep.subr.mxu0 0.0
      %872 = vmatpush2.msra.mxu0 0.0
      %873 = vmatprep.subr.mxu0 0.0
      %874 = vmatpush2.msra.mxu0 0.0
      %875 = vmatprep.subr.mxu0 0.0
      %876 = vmatpush2.msra.mxu0 0.0
      %877 = vmatprep.subr.mxu0 0.0
      %878 = vmatpush2.msra.mxu0 0.0
      %879 = vmatprep.subr.mxu0 0.0
      %880 = vmatpush2.msra.mxu0 0.0
      %881 = vmatprep.subr.mxu0 0.0
      %882 = vmatpush2.msra.mxu0 0.0
      %883 = vmatprep.subr.mxu0 0.0
      %884 = vmatpush2.msra.mxu0 0.0
      %885 = vmatprep.subr.mxu0 0.0
      %886 = vmatpush2.msra.mxu0 0.0
      %887 = vmatprep.subr.mxu0 0.0
      %888 = vmatpush2.msra.mxu0 0.0
      %889 = vmatprep.subr.mxu0 0.0
      %890 = vmatpush2.msra.mxu0 0.0
      %891 = vmatprep.subr.mxu0 0.0
      %892 = vmatpush2.msra.mxu0 0.0
      %893 = vmatprep.subr.mxu0 0.0
      %894 = vmatpush2.msra.mxu0 0.0
      %895 = vmatprep.subr.mxu0 0.0
      %896 = vmatpush2.msra.mxu0 0.0
      %897 = vmatprep.subr.mxu0 0.0
      %898 = vmatpush2.msra.mxu0 0.0
      %899 = vmatprep.subr.mxu0 0.0
      %900 = vmatpush2.msra.mxu0 0.0
      %901 = vmatprep.mubr.f32.mxu0 0.0
      %902 = vmatmul.mubr.f32.gmra.mxu0 %v826
      %v903 = vpop.f32.mrf.mxu0
      %v904 = vadd.f32 0.0, %v903
      %v905 = vpop.f32.mrf.mxu0
      %906 = vmatprep.mubr.f32.mxu0 0.0
      %907 = vmatmul.mubr.f32.gmra.mxu0 %v829
      %v908 = vpop.f32.mrf.mxu0
      %v909 = vadd.f32 0.0, %v908
      %v910 = vpop.f32.mrf.mxu0
      %911 = vmatprep.mubr.f32.mxu0 0.0
      %912 = vmatmul.mubr.f32.gmra.mxu0 %v832
      %v913 = vpop.f32.mrf.mxu0
      %v914 = vadd.f32 0.0, %v913
      %v915 = vpop.f32.mrf.mxu0
      %916 = vmatprep.mubr.f32.mxu0 0.0
      %917 = vmatmul.mubr.f32.gmra.mxu0 %v835
      %v918 = vpop.f32.mrf.mxu0
      %v919 = vadd.f32 0.0, %v918
      %v920 = vpop.f32.mrf.mxu0
      %921 = vdwg.mxu0
      %v923 = vsel %vm353, %v264, 0
      %v926 = vsel %vm353, %v265, 0
      %v929 = vsel %vm353, %v266, 0
      %v932 = vsel %vm353, %v267, 0
      %934 = vmatprep.subr.mxu0 0.0
      %935 = vmatpush1.msra.mxu0 0.0
      %936 = vmatprep.subr.mxu0 0.0
      %937 = vmatpush1.msra.mxu0 0.0
      %938 = vmatprep.subr.mxu0 0.0
      %939 = vmatpush1.msra.mxu0 0.0
      %940 = vmatprep.subr.mxu0 0.0
      %941 = vmatpush1.msra.mxu0 0.0
      %942 = vmatprep.subr.mxu0 0.0
      %943 = vmatpush1.msra.mxu0 0.0
      %944 = vmatprep.subr.mxu0 0.0
      %945 = vmatpush1.msra.mxu0 0.0
      %946 = vmatprep.subr.mxu0 0.0
      %947 = vmatpush1.msra.mxu0 0.0
      %948 = vmatprep.subr.mxu0 0.0
      %949 = vmatpush1.msra.mxu0 0.0
      %950 = vmatprep.subr.mxu0 0.0
      %951 = vmatpush1.msra.mxu0 0.0
      %952 = vmatprep.subr.mxu0 0.0
      %953 = vmatpush1.msra.mxu0 0.0
      %954 = vmatprep.subr.mxu0 0.0
      %955 = vmatpush1.msra.mxu0 0.0
      %956 = vmatprep.subr.mxu0 0.0
      %957 = vmatpush1.msra.mxu0 0.0
      %958 = vmatprep.subr.mxu0 0.0
      %959 = vmatpush1.msra.mxu0 0.0
      %960 = vmatprep.subr.mxu0 0.0
      %961 = vmatpush1.msra.mxu0 0.0
      %962 = vmatprep.subr.mxu0 0.0
      %963 = vmatpush1.msra.mxu0 %v822
      %964 = vmatprep.subr.mxu0 0.0
      %965 = vmatpush1.msra.mxu0 %v821
      %966 = vmatprep.subr.mxu0 0.0
      %967 = vmatpush2.msra.mxu0 0.0
      %968 = vmatprep.subr.mxu0 0.0
      %969 = vmatpush2.msra.mxu0 0.0
      %970 = vmatprep.subr.mxu0 0.0
      %971 = vmatpush2.msra.mxu0 0.0
      %972 = vmatprep.subr.mxu0 0.0
      %973 = vmatpush2.msra.mxu0 0.0
      %974 = vmatprep.subr.mxu0 0.0
      %975 = vmatpush2.msra.mxu0 0.0
      %976 = vmatprep.subr.mxu0 0.0
      %977 = vmatpush2.msra.mxu0 0.0
      %978 = vmatprep.subr.mxu0 0.0
      %979 = vmatpush2.msra.mxu0 0.0
      %980 = vmatprep.subr.mxu0 0.0
      %981 = vmatpush2.msra.mxu0 0.0
      %982 = vmatprep.subr.mxu0 0.0
      %983 = vmatpush2.msra.mxu0 0.0
      %984 = vmatprep.subr.mxu0 0.0
      %985 = vmatpush2.msra.mxu0 0.0
      %986 = vmatprep.subr.mxu0 0.0
      %987 = vmatpush2.msra.mxu0 0.0
      %988 = vmatprep.subr.mxu0 0.0
      %989 = vmatpush2.msra.mxu0 0.0
      %990 = vmatprep.subr.mxu0 0.0
      %991 = vmatpush2.msra.mxu0 0.0
      %992 = vmatprep.subr.mxu0 0.0
      %993 = vmatpush2.msra.mxu0 0.0
      %994 = vmatprep.subr.mxu0 0.0
      %995 = vmatpush2.msra.mxu0 0.0
      %996 = vmatprep.subr.mxu0 0.0
      %997 = vmatpush2.msra.mxu0 0.0
      %998 = vmatprep.mubr.f32.mxu0 0.0
      %999 = vmatmul.mubr.f32.gmra.mxu0 %v923
      %v1000 = vpop.f32.mrf.mxu0
      %v1001 = vadd.f32 %v904, %v1000
      %v1002 = vpop.f32.mrf.mxu0
      %1003 = vmatprep.mubr.f32.mxu0 0.0
      %1004 = vmatmul.mubr.f32.gmra.mxu0 %v926
      %v1005 = vpop.f32.mrf.mxu0
      %v1006 = vadd.f32 %v909, %v1005
      %v1007 = vpop.f32.mrf.mxu0
      %1008 = vmatprep.mubr.f32.mxu0 0.0
      %1009 = vmatmul.mubr.f32.gmra.mxu0 %v929
      %v1010 = vpop.f32.mrf.mxu0
      %v1011 = vadd.f32 %v914, %v1010
      %v1012 = vpop.f32.mrf.mxu0
      %1013 = vmatprep.mubr.f32.mxu0 0.0
      %1014 = vmatmul.mubr.f32.gmra.mxu0 %v932
      %v1015 = vpop.f32.mrf.mxu0
      %v1016 = vadd.f32 %v919, %v1015
      %v1017 = vpop.f32.mrf.mxu0
      %1018 = vdwg.mxu0
      %1020 = vset.pattern.permute.xlu0 0
      %1021 = vperm.xlu0 %1020, %v272
      %v1022 = vpop.permute.xlu0 %1021
      %1025 = vset.pattern.permute.xlu0 0
      %1026 = vperm.xlu0 %1025, %v273
      %v1027 = vpop.permute.xlu0 %1026
      %1030 = vset.pattern.permute.xlu0 0
      %1031 = vperm.xlu0 %1030, %v274
      %v1032 = vpop.permute.xlu0 %1031
      %1035 = vset.pattern.permute.xlu0 0
      %1036 = vperm.xlu0 %1035, %v275
      %v1037 = vpop.permute.xlu0 %1036
      %v1039 = vadd.f32 %v1001, %v1022
      %v1040 = vadd.f32 %v1006, %v1027
      %v1041 = vadd.f32 %v1011, %v1032
      %v1042 = vadd.f32 %v1016, %v1037
      %1043 = vst.msk [vmem:[%s251] sm:$0xff] %vm280, %v1039
      %1044 = vst.msk [vmem:[%s251 + $0x8] sm:$0xff] %vm280, %v1040
      %1045 = vst.msk [vmem:[%s251 + $0x10] sm:$0xff] %vm280, %v1041
      %1046 = vst.msk [vmem:[%s251 + $0x18] sm:$0xff] %vm280, %v1042
      %p1047 = scmp.lt.s32.totalorder %s17, 1
      %s1048 = scalar_select %p1047, %s17, 1
      %s1049 = smul.addr %s1048, 4
      %s1050 = smul.addr %s1049, 8
      %s1051 = scalar_lea.vmem %s6, %s1050
      // Predicated region
      $region45: #{shsa_forward.1} parent=43 // pred_check
        %p1052 = pneg %p166
      $region46: #{shsa_forward.1} parent=43 // pred_check_branch
        %1054 = sbr.rel (%p1052) target = $region48
      $region47: #{shsa_forward.1} parent=43 // pred_region
        _
      $region48: #{shsa_forward.1} parent=43 // pred_fallthru
        _
    $region44: #{shsa_forward.1} parent=5 // pred_fallthru
      _
    %p1055 = scmp.le.s32.totalorder 2, %s12
    // Predicated region
    $region49: #{shsa_forward.1} parent=5 // pred_check
      %p1056 = pneg %p1055
    $region50: #{shsa_forward.1} parent=5 // pred_check_branch
      %1058 = sbr.rel (%p1056) target = $region52
    $region51: #{shsa_forward.1} parent=5 // pred_region
      %s1059 = ssub.s32 %s12, 2
      // Predicated region
      $region53: #{shsa_forward.1} parent=51 // pred_check
        %p1060 = pneg %p172
      $region54: #{shsa_forward.1} parent=51 // pred_check_branch
        %1062 = sbr.rel (%p1060) target = $region56
      $region55: #{shsa_forward.1} parent=51 // pred_region
        %p1063 = scmp.lt.s32.totalorder %s18, 1
        %s1064 = scalar_select %p1063, %s18, 1
        %s1065 = smul.addr %s1064, 4
        %s1066 = smul.addr %s1065, 8
        %s1067 = scalar_lea.vmem %s6, %s1066
      $region56: #{shsa_forward.1} parent=51 // pred_fallthru
        _
    $region52: #{shsa_forward.1} parent=5 // pred_fallthru
      _
  $region6: #{shsa_forward.1} parent=0 // loop_footer
    %s16 = sadd.s32 1, %s12
  $region7: #{shsa_forward.1} parent=0 // loop_footer_branch
    %11 = sbr.rel target = $region3
  $region8: #{shsa_forward.1} parent=0 // loop_exit
    _

</llo_original>
